<compile_context>
chip_gen: v7x
topology: tpu7x:2x2x1
jax: 0.10.0
libtpu: 0.0.40
codegen_flags: <defaults>
</compile_context>

<pallas_src>
import functools

import numpy as np

import jax
import jax.numpy as jnp
from jax.experimental import pallas as pl
from jax.experimental.pallas import tpu as pltpu

_LANE = 128
_SUBLANE = 8


def _round_up(x, m):
    return (x + m - 1) // m * m


def fuse_qkv_params(wq, bq, wk, bk, wv, bv):
    """Fuse (and lane-pad) the three projection weights/biases.

    Weights are in (in, out) = (E, E) layout (i.e. torch.nn.Linear.weight.T);
    biases may be (E,) or (1, E).  Each projection's output columns are
    zero-padded to Ep = round_up(E, 128) so the fused weight is (E, 3*Ep) and
    in-kernel q/k/v slices are 128-lane aligned.  Call ONCE at parameter
    setup time (hoisted out of the per-call forward path).
    """
    E = wq.shape[0]
    Ep = _round_up(E, _LANE)

    def pad_w(w):
        return w if Ep == E else jnp.pad(w, ((0, 0), (0, Ep - E)))

    def pad_b(b):
        b = b.reshape(1, E)
        return b if Ep == E else jnp.pad(b, ((0, 0), (0, Ep - E)))

    w_qkv = jnp.concatenate([pad_w(wq), pad_w(wk), pad_w(wv)], axis=1)  # (E, 3*Ep)
    b_qkv = jnp.concatenate([pad_b(bq), pad_b(bk), pad_b(bv)], axis=1)  # (1, 3*Ep)
    return w_qkv, b_qkv


def _self_attention_kernel(x_ref, w_ref, b_ref, o_ref, *,
                           inv_scale, mxu_dtype, flatten_out):
    TB, S, E = x_ref.shape
    Ep = w_ref.shape[1] // 3

    w = w_ref[...].astype(mxu_dtype)           # (E, 3*Ep) fused, lane-padded
    b = b_ref[...].astype(jnp.float32)         # (1, 3*Ep)

    if S % _SUBLANE == 0:
        # (TB, S, E) -> (TB*S, E) is a free sublane-merge when S % 8 == 0.
        x2 = x_ref[...].reshape(TB * S, E).astype(mxu_dtype)
        qkv = jnp.dot(x2, w, preferred_element_type=jnp.float32) + b   # (TB*S, 3Ep)
        # 128-lane-aligned slices (offsets 0 / Ep / 2*Ep); scale q, not scores.
        q = (qkv[:, 0 * Ep:0 * Ep + E] * inv_scale).reshape(TB, S, E)
        k = qkv[:, 1 * Ep:1 * Ep + E].reshape(TB, S, E)
        v = qkv[:, 2 * Ep:2 * Ep + E].reshape(TB, S, E)
    else:
        # Reshape would cross (8,128) tiles -> keep 3D, batched contraction.
        x3 = x_ref[...].astype(mxu_dtype)
        qkv = jnp.einsum('bse,ef->bsf', x3, w,
                         preferred_element_type=jnp.float32) + b       # (TB,S,3Ep)
        q = qkv[..., 0 * Ep:0 * Ep + E] * inv_scale
        k = qkv[..., 1 * Ep:1 * Ep + E]
        v = qkv[..., 2 * Ep:2 * Ep + E]

    # Scores: contract q.k on E directly (no explicit k.T through the XLU).
    scores = jnp.einsum('bqd,bkd->bqk',
                        q.astype(mxu_dtype), k.astype(mxu_dtype),
                        preferred_element_type=jnp.float32)            # (TB,S,S)

    # Softmax in f32; the divide goes to the EUP via the approx reciprocal.
    m = jnp.max(scores, axis=-1, keepdims=True)
    p = jnp.exp(scores - m)
    denom = jnp.sum(p, axis=-1, keepdims=True)
    attn = p * pl.reciprocal(denom, approx=True)                        # (TB,S,S)

    out = jnp.einsum('bqk,bkd->bqd',
                     attn.astype(mxu_dtype), v.astype(mxu_dtype),
                     preferred_element_type=jnp.float32)                # (TB,S,E)

    if flatten_out:
        # Lane-dense store: (TB, 1, S*E), S*E a multiple of 128 -> unmasked vst.
        o_ref[...] = out.reshape(TB, 1, S * E).astype(o_ref.dtype)
    else:
        o_ref[...] = out.astype(o_ref.dtype)


def _estimate_step_vmem_bytes(tb, S, E, Ep, x_itemsize, w_itemsize, mxu_itemsize):
    """Rough per-grid-step VMEM footprint (bytes) for a batch_block of tb."""
    m = tb * S
    total = 0
    total += 2 * 2 * m * E * x_itemsize            # x + out tiles, double-buffered
    total += (E * 3 * Ep + 3 * Ep) * w_itemsize    # fused weight + bias (1 buffer)
    total += m * 3 * Ep * 4                        # qkv (f32)
    total += 2 * m * S * 4                         # scores + exp(scores) (f32)
    total += m * E * 4                             # output accumulator (f32)
    total += 2 * m * (E + Ep) * mxu_itemsize       # mxu-dtype operand copies
    return int(total * 1.25)                       # headroom for compiler temps


def _pick_batch_block(B, S, E, Ep, x_itemsize, w_itemsize, mxu_itemsize,
                      vmem_budget_bytes, min_grid_steps):
    best = 1
    for tb in range(1, B + 1):
        if B % tb:
            continue
        if tb != 1:
            if B // tb < min_grid_steps:
                continue          # keep >= min_grid_steps steps (v7x: 2 TCs)
            if _estimate_step_vmem_bytes(tb, S, E, Ep, x_itemsize, w_itemsize,
                                         mxu_itemsize) > vmem_budget_bytes:
                continue
        best = tb                 # ascending loop -> largest valid divisor
    return best


def self_attention(x, w_qkv, b_qkv, *,
                   mxu_dtype=None,
                   batch_block=None,
                   min_grid_steps=2,
                   vmem_budget_bytes=40 * 1024 * 1024,
                   vmem_limit_bytes=None):
    """softmax((x Wq)(x Wk)^T / sqrt(E)) (x Wv) with fused, lane-padded params.

    w_qkv / b_qkv come from fuse_qkv_params().  x: (B, S, E).
      mxu_dtype=None       -> bf16 MXU operands, f32 accumulation (recommended
                              on v5e/v6e/v7x); pass jnp.float32 for exact f32.
      min_grid_steps=2     -> keeps >= 2 grid steps so the "parallel" batch
                              axis can shard across v7x's 2 TensorCores;
                              single-TC chips (v5e/v6e) may pass 1.
      vmem_budget_bytes    -> conservative cross-generation default (v7x has
                              64 MiB/TC); raise to ~96 MiB on v5e/v6e.
    """
    B, S, E = x.shape
    Ep = w_qkv.shape[1] // 3
    assert w_qkv.shape == (E, 3 * Ep) and b_qkv.shape == (1, 3 * Ep), \
        "pass params through fuse_qkv_params()"

    if mxu_dtype is None:
        mxu_dtype = jnp.bfloat16            # native MXU dtype on all gens
    x_itemsize = np.dtype(x.dtype).itemsize
    w_itemsize = np.dtype(w_qkv.dtype).itemsize
    mxu_itemsize = np.dtype(mxu_dtype).itemsize

    if batch_block is None:
        batch_block = _pick_batch_block(B, S, E, Ep, x_itemsize, w_itemsize,
                                        mxu_itemsize, vmem_budget_bytes,
                                        min_grid_steps)
    assert B % batch_block == 0, "batch_block must divide B"
    grid = (B // batch_block,)

    est_vmem = _estimate_step_vmem_bytes(batch_block, S, E, Ep, x_itemsize,
                                         w_itemsize, mxu_itemsize)
    if vmem_limit_bytes is None and est_vmem > (14 << 20):
        # Default scoped VMEM is 16 MiB (v5e) / 32 MiB (v6e, v7x); raise it for
        # large tiles, but stay well under v7x's 64 MiB physical per-TC.
        vmem_limit_bytes = int(min(max(est_vmem + (4 << 20), 32 << 20), 48 << 20))

    # Lane-dense output slab when E is not a multiple of 128 (otherwise each
    # store would be a masked vst.msk partial store).
    flatten_out = (E % _LANE != 0) and ((S * E) % _LANE == 0)
    if flatten_out:
        out_shape = jax.ShapeDtypeStruct((B, 1, S * E), x.dtype)
        out_spec = pl.BlockSpec((batch_block, 1, S * E), lambda i: (i, 0, 0))
    else:
        out_shape = jax.ShapeDtypeStruct((B, S, E), x.dtype)
        out_spec = pl.BlockSpec((batch_block, S, E), lambda i: (i, 0, 0))

    # Grid-invariant operands -> single buffer (no 2x weight tile in VMEM).
    weight_mode = pl.Buffered(1)

    kernel = functools.partial(
        _self_attention_kernel,
        inv_scale=float(1.0 / (E ** 0.5)),
        mxu_dtype=mxu_dtype,
        flatten_out=flatten_out,
    )

    out = pl.pallas_call(
        kernel,
        out_shape=out_shape,
        grid_spec=pltpu.PrefetchScalarGridSpec(
            num_scalar_prefetch=0,
            grid=grid,
            in_specs=[
                pl.BlockSpec((batch_block, S, E), lambda i: (i, 0, 0)),     # x
                pl.BlockSpec((E, 3 * Ep), lambda i: (0, 0),
                             pipeline_mode=weight_mode),                    # W_qkv
                pl.BlockSpec((1, 3 * Ep), lambda i: (0, 0),
                             pipeline_mode=weight_mode),                    # b_qkv
            ],
            out_specs=out_spec,
        ),
        compiler_params=pltpu.CompilerParams(
            dimension_semantics=("parallel",),
            vmem_limit_bytes=vmem_limit_bytes,
        ),
    )(x, w_qkv, b_qkv)

    if flatten_out:
        out = out.reshape(B, S, E)
    return out


def reference(x, wq, bq, wk, bk, wv, bv):
    """Pure-JAX mirror of the PyTorch SelfAttention forward (f32)."""
    E = x.shape[-1]
    q = x @ wq + bq.reshape(1, E)
    k = x @ wk + bk.reshape(1, E)
    v = x @ wv + bv.reshape(1, E)
    scores = (q @ jnp.swapaxes(k, -2, -1)) / (E ** 0.5)
    attn = jax.nn.softmax(scores, axis=-1)
    return attn @ v


if __name__ == "__main__":
    B, S, E = 2, 8, 32
    key = jax.random.PRNGKey(0)
    kx, kq, kk, kv_, kbq, kbk, kbv = jax.random.split(key, 7)

    x = jax.random.normal(kx, (B, S, E), dtype=jnp.float32)
    # Projection params stored as (in, out); pass torch Linear weight.T here.
    wq = jax.random.normal(kq, (E, E), dtype=jnp.float32) * 0.1
    wk = jax.random.normal(kk, (E, E), dtype=jnp.float32) * 0.1
    wv = jax.random.normal(kv_, (E, E), dtype=jnp.float32) * 0.1
    bq = jax.random.normal(kbq, (E,), dtype=jnp.float32) * 0.1
    bk = jax.random.normal(kbk, (E,), dtype=jnp.float32) * 0.1
    bv = jax.random.normal(kbv, (E,), dtype=jnp.float32) * 0.1

    # Parameter fusion / lane padding hoisted to setup time (done once).
    w_qkv, b_qkv = fuse_qkv_params(wq, bq, wk, bk, wv, bv)

    ref = reference(x, wq, bq, wk, bk, wv, bv)

    # Default fast path: bf16 MXU operands, f32 accumulation + f32 softmax.
    out = jax.block_until_ready(self_attention(x, w_qkv, b_qkv))
    assert out.shape == (B, S, E)
    assert jnp.allclose(out, ref, atol=3e-2, rtol=3e-2), "bf16-MXU path mismatch"

    # Full-precision MXU path (tolerance covers the EUP approx reciprocal).
    out_f32 = jax.block_until_ready(
        self_attention(x, w_qkv, b_qkv, mxu_dtype=jnp.float32))
    assert jnp.allclose(out_f32, ref, atol=2e-3, rtol=2e-3), "f32-MXU path mismatch"

    print("KERNEL_OK")
</pallas_src>

<mosaic_0001>
module attributes {stable_mosaic.version = 11 : i64} {
  func.func @_self_attention_kernel(%arg0: i32, %arg1: memref<1x8x32xf32, #tpu.memory_space<vmem>>, %arg2: memref<32x384xf32, #tpu.memory_space<vmem>>, %arg3: memref<1x384xf32, #tpu.memory_space<vmem>>, %arg4: memref<1x1x256xf32, #tpu.memory_space<vmem>>) attributes {dimension_semantics = [#tpu.dimension_semantics<parallel>], iteration_bounds = array<i64: 2>, scalar_prefetch = 0 : i64, scratch_operands = 0 : i64, tpu.core_type = #tpu.core_type<tc>, window_params = [{transform_indices = @transform_0, window_bounds = array<i64: 1, 8, 32>}, {pipeline_mode = #tpu.pipeline_mode<synchronous>, transform_indices = @transform_1, window_bounds = array<i64: 32, 384>}, {pipeline_mode = #tpu.pipeline_mode<synchronous>, transform_indices = @transform_2, window_bounds = array<i64: 1, 384>}, {transform_indices = @transform_3, window_bounds = array<i64: 1, 1, 256>}]} {
    %c0 = arith.constant 0 : index
    %c0_0 = arith.constant 0 : index
    %0 = vector.load %arg2[%c0, %c0_0] : memref<32x384xf32, #tpu.memory_space<vmem>>, vector<32x384xf32>
    %1 = arith.truncf %0 : vector<32x384xf32> to vector<32x384xbf16>
    %c0_1 = arith.constant 0 : index
    %c0_2 = arith.constant 0 : index
    %2 = vector.load %arg3[%c0_1, %c0_2] : memref<1x384xf32, #tpu.memory_space<vmem>>, vector<1x384xf32>
    %c0_3 = arith.constant 0 : index
    %c0_4 = arith.constant 0 : index
    %c0_5 = arith.constant 0 : index
    %3 = vector.load %arg1[%c0_3, %c0_4, %c0_5] : memref<1x8x32xf32, #tpu.memory_space<vmem>>, vector<1x8x32xf32>
    %4 = vector.shape_cast %3 : vector<1x8x32xf32> to vector<8x32xf32>
    %5 = arith.truncf %4 : vector<8x32xf32> to vector<8x32xbf16>
    %cst = arith.constant dense<0.000000e+00> : vector<8x384xf32>
    %6 = tpu.matmul %5, %1, %cst {dimension_numbers = #tpu.dot_dimension_numbers<[1], [0], [0], [1], [0, 0, 1, 1], [], []>} : vector<8x32xbf16>, vector<32x384xbf16>, vector<8x384xf32> -> vector<8x384xf32>
    %7 = vector.broadcast %2 : vector<1x384xf32> to vector<8x384xf32>
    %8 = arith.addf %6, %7 : vector<8x384xf32>
    %9 = vector.extract_strided_slice %8 {offsets = [0, 0], sizes = [8, 32], strides = [1, 1]} : vector<8x384xf32> to vector<8x32xf32>
    %cst_6 = arith.constant 0.176776692 : f32
    %10 = vector.broadcast %cst_6 : f32 to vector<8x32xf32>
    %11 = arith.mulf %9, %10 : vector<8x32xf32>
    %12 = vector.shape_cast %11 : vector<8x32xf32> to vector<1x8x32xf32>
    %13 = vector.extract_strided_slice %8 {offsets = [0, 128], sizes = [8, 32], strides = [1, 1]} : vector<8x384xf32> to vector<8x32xf32>
    %14 = vector.shape_cast %13 : vector<8x32xf32> to vector<1x8x32xf32>
    %15 = vector.extract_strided_slice %8 {offsets = [0, 256], sizes = [8, 32], strides = [1, 1]} : vector<8x384xf32> to vector<8x32xf32>
    %16 = vector.shape_cast %15 : vector<8x32xf32> to vector<1x8x32xf32>
    %17 = arith.truncf %12 : vector<1x8x32xf32> to vector<1x8x32xbf16>
    %18 = arith.truncf %14 : vector<1x8x32xf32> to vector<1x8x32xbf16>
    "tpu.trace_start"() <{level = 10 : i32, message = "bqd,bkd->bqk"}> : () -> ()
    %cst_7 = arith.constant dense<0.000000e+00> : vector<1x8x8xf32>
    %19 = tpu.matmul %17, %18, %cst_7 {dimension_numbers = #tpu.dot_dimension_numbers<[2], [2], [1], [1], [0, 0, 0, 1, 1, 1], [0], [0]>} : vector<1x8x32xbf16>, vector<1x8x32xbf16>, vector<1x8x8xf32> -> vector<1x8x8xf32>
    "tpu.trace_stop"() : () -> ()
    %cst_8 = arith.constant dense<0xFF800000> : vector<1x8xf32>
    %20 = vector.multi_reduction <maximumf>, %19, %cst_8 [2] : vector<1x8x8xf32> to vector<1x8xf32>
    %21 = vector.shape_cast %20 : vector<1x8xf32> to vector<1x8x1xf32>
    %22 = vector.broadcast %21 : vector<1x8x1xf32> to vector<1x8x8xf32>
    %23 = arith.subf %19, %22 : vector<1x8x8xf32>
    %24 = math.exp %23 : vector<1x8x8xf32>
    %cst_9 = arith.constant dense<0.000000e+00> : vector<1x8xf32>
    %25 = vector.multi_reduction <add>, %24, %cst_9 [2] : vector<1x8x8xf32> to vector<1x8xf32>
    %26 = vector.shape_cast %25 : vector<1x8xf32> to vector<1x8x1xf32>
    %27 = tpu.reciprocal %26 {approx = true} : vector<1x8x1xf32> -> vector<1x8x1xf32>
    %28 = vector.broadcast %27 : vector<1x8x1xf32> to vector<1x8x8xf32>
    %29 = arith.mulf %24, %28 : vector<1x8x8xf32>
    %30 = arith.truncf %29 : vector<1x8x8xf32> to vector<1x8x8xbf16>
    %31 = arith.truncf %16 : vector<1x8x32xf32> to vector<1x8x32xbf16>
    "tpu.trace_start"() <{level = 10 : i32, message = "bqk,bkd->bqd"}> : () -> ()
    %cst_10 = arith.constant dense<0.000000e+00> : vector<1x8x32xf32>
    %32 = tpu.matmul %30, %31, %cst_10 {dimension_numbers = #tpu.dot_dimension_numbers<[2], [1], [1], [2], [0, 0, 0, 1, 1, 2], [0], [0]>} : vector<1x8x8xbf16>, vector<1x8x32xbf16>, vector<1x8x32xf32> -> vector<1x8x32xf32>
    "tpu.trace_stop"() : () -> ()
    %33 = vector.shape_cast %32 : vector<1x8x32xf32> to vector<1x1x256xf32>
    %c0_11 = arith.constant 0 : index
    %c0_12 = arith.constant 0 : index
    %c0_13 = arith.constant 0 : index
    %34 = vector.load %arg4[%c0_11, %c0_12, %c0_13] : memref<1x1x256xf32, #tpu.memory_space<vmem>>, vector<1x1x256xf32>
    tpu.vector_store %arg4[%c0_11, %c0_12, %c0_13], %33 {strides = array<i32>} : memref<1x1x256xf32, #tpu.memory_space<vmem>>, vector<1x1x256xf32>,
    return
  }
  func.func @transform_0(%arg0: i32) -> (i32, i32, i32) {
    %c0_i32 = arith.constant 0 : i32
    %c0_i32_0 = arith.constant 0 : i32
    %c0_i32_1 = arith.constant 0 : i32
    return %arg0, %c0_i32, %c0_i32_0 : i32, i32, i32
  }
  func.func @transform_1(%arg0: i32) -> (i32, i32) {
    %c0_i32 = arith.constant 0 : i32
    %c0_i32_0 = arith.constant 0 : i32
    %c0_i32_1 = arith.constant 0 : i32
    return %c0_i32, %c0_i32_0 : i32, i32
  }
  func.func @transform_2(%arg0: i32) -> (i32, i32) {
    %c0_i32 = arith.constant 0 : i32
    %c0_i32_0 = arith.constant 0 : i32
    %c0_i32_1 = arith.constant 0 : i32
    return %c0_i32, %c0_i32_0 : i32, i32
  }
  func.func @transform_3(%arg0: i32) -> (i32, i32, i32) {
    %c0_i32 = arith.constant 0 : i32
    %c0_i32_0 = arith.constant 0 : i32
    %c0_i32_1 = arith.constant 0 : i32
    return %arg0, %c0_i32, %c0_i32_0 : i32, i32, i32
  }
}

</mosaic_0001>

<llo_original>
// kernel: tpu_custom_call.1
$region0: #{tpu_custom_call.1}
  #allocation0 [shape = 'u32[]', space=smem, size = 0x4, offset = 0x4, fixed_abs, tag = 'smem constant byte address 0x4 - core index']
  #allocation1 [shape = 'u32[144,128]{1,0:T(1,128)}', space=vmem, size = 0x12000, scoped, tag = 'internal scratch']
  %s0 = inlined_call_operand.hbm [shape: f32[2,8,32], index: 0, kind: input, shape index: {}]
  %s1 = inlined_call_operand.hbm [shape: f32[32,384], index: 1, kind: input, shape index: {}]
  %s2 = inlined_call_operand.vmem [shape: f32[1,384], index: 2, kind: input, shape index: {}]
  %s3 = inlined_call_operand.hbm [shape: f32[2,1,256], index: 3, kind: output, shape index: {}]
  %s4 = sld [smem:[#allocation0]]
  $region53: #{tpu_custom_call.1} parent=0
    _
  %s6 = ssub.s32 1, %s4
  %s7 = scalar_select 0, %s6, %s4
  $region1: #{tpu_custom_call.1} parent=0
    #allocation2 [shape = 'u8[8192]{0}', space=vmem, size = 0x2000, scoped, tag = 'input window, operand 0']
    #allocation3 [shape = 's32[2]{0}', space=sflag, size = 0x8, scoped, tag = 'scoped memory for tpu_custom_call.1']
    #allocation4 [shape = 's32[2]{0}', space=sflag, size = 0x8, scoped, tag = 'scoped memory for tpu_custom_call.1']
    #allocation5 [shape = 'u8[49152]{0}', space=vmem, size = 0xc000, scoped, tag = 'input window, operand 1, single buffered']
    #allocation6 [shape = 's32[1]{0}', space=sflag, size = 0x4, scoped, tag = 'scoped memory for tpu_custom_call.1']
    #allocation7 [shape = 'u8[2048]{0}', space=vmem, size = 0x800, scoped, tag = 'output window, operand 0']
    %8 = vsyncpa [#allocation3], 0
    %s9 = scalar_lea.sflag [#allocation3], 1
    %10 = vsyncpa %s9, 0
    %11 = vsyncpa [#allocation6], 0
    %12 = vsyncpa [#allocation4], 0
    %s13 = scalar_lea.sflag [#allocation4], 1
    %14 = vsyncpa %s13, 0
    loop: start=0, step=1, limit=4
    $region2: #{tpu_custom_call.1} parent=1 // loop_pre_header
      _
    $region3: #{tpu_custom_call.1} parent=1 // loop_header
      %s16 = sphi 0, %s20
      %p17 = scmp.ge.s32.totalorder %s16, 4
      %s26 = sphi 0, %s28
      %s29 = sphi 0, %s26
      %s30 = sphi 0, %s29
      %s46 = sphi 0, %s30
      %s50 = sphi 0, %s50
      %s52 = sphi 0, %s50
      %s53 = sphi 0, %s52
      %s67 = sphi 0, %s53
      %s71 = sphi 0, %s71
      %s73 = sphi 0, %s71
      %s74 = sphi 0, %s73
      %s88 = sphi 0, %s74
      %s94 = sphi 0, %s96
      %s97 = sphi 0, %s94
      %s98 = sphi 0, %s97
      %s114 = sphi 0, %s98
    $region4: #{tpu_custom_call.1} parent=1 // loop_header_branch
      %19 = sbr.rel (%p17) target = $region8
    $region5: #{tpu_custom_call.1} parent=1 // loop_body
      %s21 = ssub.s32 %s16, 1
      %s22 = ssub.s32 %s16, 2
      %s23 = sadd.s32 %s16, 1
      %s24 = ssub.s32 %s16, %s23
      %p25 = scmp.eq.s32.totalorder %s24, 0
      %s27 = sadd.s32 %s26, 1
      %s28 = scalar_select %p25, %s26, %s27
      %p31 = pneg %p25
      %p32 = scmp.eq.s32.totalorder %s16, 1
      %p33 = por %p31, %p32
      %p34 = scmp.ne.s32.totalorder %s26, %s29
      %p35 = scmp.eq.s32.totalorder %s16, 0
      %p36 = por %p34, %p35
      %p37 = scmp.ne.s32.totalorder %s26, %s29
      %p38 = scmp.eq.s32.totalorder %s21, 1
      %p39 = por %p37, %p38
      %p40 = scmp.ne.s32.totalorder %s29, %s30
      %p41 = scmp.eq.s32.totalorder %s21, 0
      %p42 = por %p40, %p41
      %p43 = scmp.ne.s32.totalorder %s29, %s30
      %p44 = scmp.eq.s32.totalorder %s22, 1
      %p45 = por %p43, %p44
      %p47 = scmp.ne.s32.totalorder %s30, %s46
      %p48 = scmp.eq.s32.totalorder %s22, 0
      %p49 = por %p47, %p48
      %s51 = sadd.s32 %s50, 1
      %p54 = scmp.eq.s32.totalorder %s16, 1
      %p55 = scmp.ne.s32.totalorder %s50, %s52
      %p56 = scmp.eq.s32.totalorder %s16, 0
      %p57 = por %p55, %p56
      %p58 = scmp.ne.s32.totalorder %s50, %s52
      %p59 = scmp.eq.s32.totalorder %s21, 1
      %p60 = por %p58, %p59
      %p61 = scmp.ne.s32.totalorder %s52, %s53
      %p62 = scmp.eq.s32.totalorder %s21, 0
      %p63 = por %p61, %p62
      %p64 = scmp.ne.s32.totalorder %s52, %s53
      %p65 = scmp.eq.s32.totalorder %s22, 1
      %p66 = por %p64, %p65
      %p68 = scmp.ne.s32.totalorder %s53, %s67
      %p69 = scmp.eq.s32.totalorder %s22, 0
      %p70 = por %p68, %p69
      %s72 = sadd.s32 %s71, 1
      %p75 = scmp.eq.s32.totalorder %s16, 1
      %p76 = scmp.ne.s32.totalorder %s71, %s73
      %p77 = scmp.eq.s32.totalorder %s16, 0
      %p78 = por %p76, %p77
      %p79 = scmp.ne.s32.totalorder %s71, %s73
      %p80 = scmp.eq.s32.totalorder %s21, 1
      %p81 = por %p79, %p80
      %p82 = scmp.ne.s32.totalorder %s73, %s74
      %p83 = scmp.eq.s32.totalorder %s21, 0
      %p84 = por %p82, %p83
      %p85 = scmp.ne.s32.totalorder %s73, %s74
      %p86 = scmp.eq.s32.totalorder %s22, 1
      %p87 = por %p85, %p86
      %p89 = scmp.ne.s32.totalorder %s74, %s88
      %p90 = scmp.eq.s32.totalorder %s22, 0
      %p91 = por %p89, %p90
      %s92 = ssub.s32 %s16, %s23
      %p93 = scmp.eq.s32.totalorder %s92, 0
      %s95 = sadd.s32 %s94, 1
      %s96 = scalar_select %p93, %s94, %s95
      %p99 = pneg %p93
      %p100 = scmp.eq.s32.totalorder %s16, 1
      %p101 = por %p99, %p100
      %p102 = scmp.ne.s32.totalorder %s94, %s97
      %p103 = scmp.eq.s32.totalorder %s16, 0
      %p104 = por %p102, %p103
      %p105 = scmp.ne.s32.totalorder %s94, %s97
      %p106 = scmp.eq.s32.totalorder %s21, 1
      %p107 = por %p105, %p106
      %p108 = scmp.ne.s32.totalorder %s97, %s98
      %p109 = scmp.eq.s32.totalorder %s21, 0
      %p110 = por %p108, %p109
      %p111 = scmp.ne.s32.totalorder %s97, %s98
      %p112 = scmp.eq.s32.totalorder %s22, 1
      %p113 = por %p111, %p112
      %p115 = scmp.ne.s32.totalorder %s98, %s114
      %p116 = scmp.eq.s32.totalorder %s22, 0
      %p117 = por %p115, %p116
      %p118 = scmp.le.s32.totalorder 1, %s16
      %p119 = scmp.lt.s32.totalorder %s16, 3
      %p120 = pnand %p118, %p119
      %p121 = pneg %p120
      // Predicated region
      $region9: #{tpu_custom_call.1} parent=5 // pred_check
        _
      $region10: #{tpu_custom_call.1} parent=5 // pred_check_branch
        %123 = sbr.rel (%p120) target = $region12
      $region11: #{tpu_custom_call.1} parent=5 // pred_region
        %s124 = ssub.s32 %s16, 1
        // Predicated region
        $region13: #{tpu_custom_call.1} parent=11 // pred_check
          %p125 = pneg %p63
        $region14: #{tpu_custom_call.1} parent=11 // pred_check_branch
          %127 = sbr.rel (%p125) target = $region16
        $region15: #{tpu_custom_call.1} parent=11 // pred_region
          %s129 = ssub.s32 1536, 1536
          %130 = vsyncadd [#allocation6], %s129
          %s131 = sshll.u32 [#allocation5], 4
          %s132 = int_to_ptr.vmem [resolvable:$true] %s131
          %137 = dma.hbm_to_vmem [thread:$0]  %s1, 1536, %s132, [#allocation6], 384, 384, 24
        $region16: #{tpu_custom_call.1} parent=11 // pred_fallthru
          _
        // Predicated region
        $region17: #{tpu_custom_call.1} parent=11 // pred_check
          %p138 = pneg %p84
        $region18: #{tpu_custom_call.1} parent=11 // pred_check_branch
          %140 = sbr.rel (%p138) target = $region20
        $region19: #{tpu_custom_call.1} parent=11 // pred_region
          _
        $region20: #{tpu_custom_call.1} parent=11 // pred_fallthru
          _
      $region12: #{tpu_custom_call.1} parent=5 // pred_fallthru
        _
      %p141 = scmp.lt.s32.totalorder %s16, 2
      // Predicated region
      $region21: #{tpu_custom_call.1} parent=5 // pred_check
        %p142 = pneg %p141
      $region22: #{tpu_custom_call.1} parent=5 // pred_check_branch
        %144 = sbr.rel (%p142) target = $region24
      $region23: #{tpu_custom_call.1} parent=5 // pred_region
        // Predicated region
        $region25: #{tpu_custom_call.1} parent=23 // pred_check
          %p145 = pneg %p36
        $region26: #{tpu_custom_call.1} parent=23 // pred_check_branch
          %147 = sbr.rel (%p145) target = $region28
        $region27: #{tpu_custom_call.1} parent=23 // pred_region
          %s148 = sand.u32 %s26, 1
          %s149 = scalar_lea.sflag [#allocation3], %s148
          %s150 = sand.u32 %s26, 1
          %s151 = smul.addr %s150, 8
          %s152 = scalar_lea.vmem [#allocation2], %s151
          %s154 = ssub.s32 128, 128
          %155 = vsyncadd %s149, %s154
          %s156 = smul.addr %s16, 128
          %s157 = scalar_lea.hbm %s0, %s156
          %s159 = sshll.u32 %s152, 4
          %s160 = int_to_ptr.vmem [resolvable:$true] %s159
          %162 = dma.hbm_to_vmem [thread:$0]  %s157, 128, %s160, %s149
        $region28: #{tpu_custom_call.1} parent=23 // pred_fallthru
          _
      $region24: #{tpu_custom_call.1} parent=5 // pred_fallthru
        _
      %p163 = scmp.le.s32.totalorder 1, %s16
      %p164 = scmp.lt.s32.totalorder %s16, 3
      %p165 = pnand %p163, %p164
      %p166 = pneg %p165
      // Predicated region
      $region29: #{tpu_custom_call.1} parent=5 // pred_check
        _
      $region30: #{tpu_custom_call.1} parent=5 // pred_check_branch
        %168 = sbr.rel (%p165) target = $region32
      $region31: #{tpu_custom_call.1} parent=5 // pred_region
        %s169 = ssub.s32 %s16, 1
        %s170 = sand.u32 %s29, 1
        %s171 = scalar_lea.sflag [#allocation3], %s170
        %s172 = sand.u32 %s29, 1
        %s173 = smul.addr %s172, 8
        %s174 = scalar_lea.vmem [#allocation2], %s173
        // Predicated region
        $region33: #{tpu_custom_call.1} parent=31 // pred_check
          %p175 = pneg %p42
        $region34: #{tpu_custom_call.1} parent=31 // pred_check_branch
          %177 = sbr.rel (%p175) target = $region36
        $region35: #{tpu_custom_call.1} parent=31 // pred_region
          %178 = dma.done %s171, 128
        $region36: #{tpu_custom_call.1} parent=31 // pred_fallthru
          _
        // Predicated region
        $region37: #{tpu_custom_call.1} parent=31 // pred_check
          %p179 = pneg %p63
        $region38: #{tpu_custom_call.1} parent=31 // pred_check_branch
          %181 = sbr.rel (%p179) target = $region40
        $region39: #{tpu_custom_call.1} parent=31 // pred_region
          %182 = dma.done [#allocation6], 1536
        $region40: #{tpu_custom_call.1} parent=31 // pred_fallthru
          _
        %s183 = sand.u32 %s29, 1
        %s184 = scalar_lea.sflag [#allocation3], %s183
        %s185 = sand.u32 %s29, 1
        %s186 = smul.addr %s185, 8
        %s187 = scalar_lea.vmem [#allocation2], %s186
        %p188 = pneg %p42
        %p189 = pneg %p39
        %p190 = pneg %p63
        %p191 = pneg %p60
        %p192 = pneg %p84
        %p193 = pneg %p81
        %p194 = pneg %p110
        %p195 = pneg %p107
        %s196 = sand.u32 %s97, 1
        %s197 = scalar_lea.sflag [#allocation4], %s196
        %s198 = sand.u32 %s97, 1
        %s199 = smul.addr %s198, 2
        %s200 = scalar_lea.vmem [#allocation7], %s199
        %v202 = vld [vmem:[#allocation5] sm:$0xff]
        %v203 = vld [vmem:[#allocation5 + $0x8] sm:$0xff]
        %v204 = vld [vmem:[#allocation5 + $0x10] sm:$0xff]
        %v205 = vld [vmem:[#allocation5 + $0x18] sm:$0xff]
        %v206 = vld [vmem:[#allocation5 + $0x20] sm:$0xff]
        %v207 = vld [vmem:[#allocation5 + $0x28] sm:$0xff]
        %v208 = vld [vmem:[#allocation5 + $0x30] sm:$0xff]
        %v209 = vld [vmem:[#allocation5 + $0x38] sm:$0xff]
        %v210 = vld [vmem:[#allocation5 + $0x40] sm:$0xff]
        %v211 = vld [vmem:[#allocation5 + $0x48] sm:$0xff]
        %v212 = vld [vmem:[#allocation5 + $0x50] sm:$0xff]
        %v213 = vld [vmem:[#allocation5 + $0x58] sm:$0xff]
        %v214 = vpack.c.bf16 %v205, %v202
        %v215 = vpack.c.bf16 %v206, %v203
        %v216 = vpack.c.bf16 %v207, %v204
        %v217 = vpack.c.bf16 %v211, %v208
        %v218 = vpack.c.bf16 %v212, %v209
        %v219 = vpack.c.bf16 %v213, %v210
        %v220 = vld [vmem:[%s2] sm:$0x7]
        %v221 = vld [vmem:[%s174] sm:$0xff]
        %v222 = vpack.c.bf16 %v221, %v221
        %v224 = vlaneseq
        %v225 = vshrl.u32 %v224, 7
        %v226 = vsub.s32 0, %v225
        %v227 = vrot.slane %v220, %v226
        %v228 = vlaneseq
        %v229 = vshrl.u32 %v228, 7
        %v230 = vsub.s32 1, %v229
        %v231 = vrot.slane %v220, %v230
        %v232 = vlaneseq
        %v233 = vshrl.u32 %v232, 7
        %v234 = vsub.s32 2, %v233
        %v235 = vrot.slane %v220, %v234
        %vm239 = vcmask 261120
        %v241 = vsel %vm239, %v222, 0
        %243 = vmatprep.subr.bf16.mxu0 %v215
        %244 = vmatpush1.bf16.msra.mxu0 %v214
        %245 = vmatprep.subr.bf16.mxu0 %v218
        %246 = vmatpush1.bf16.msra.mxu0 %v217
        %247 = vmatprep.subr.bf16.mxu0 0
        %248 = vmatpush1.bf16.msra.mxu0 0
        %249 = vmatprep.subr.bf16.mxu0 0
        %250 = vmatpush1.bf16.msra.mxu0 0
        %251 = vmatprep.subr.bf16.mxu0 0
        %252 = vmatpush1.bf16.msra.mxu0 0
        %253 = vmatprep.subr.bf16.mxu0 0
        %254 = vmatpush1.bf16.msra.mxu0 0
        %255 = vmatprep.subr.bf16.mxu0 0
        %256 = vmatpush1.bf16.msra.mxu0 0
        %257 = vmatprep.subr.bf16.mxu0 0
        %258 = vmatpush1.bf16.msra.mxu0 0
        %259 = vmatprep.subr.bf16.mxu0 0
        %260 = vmatpush1.bf16.msra.mxu0 0
        %261 = vmatprep.subr.bf16.mxu0 0
        %262 = vmatpush1.bf16.msra.mxu0 0
        %263 = vmatprep.subr.bf16.mxu0 0
        %264 = vmatpush1.bf16.msra.mxu0 0
        %265 = vmatprep.subr.bf16.mxu0 0
        %266 = vmatpush1.bf16.msra.mxu0 0
        %267 = vmatprep.subr.bf16.mxu0 0
        %268 = vmatpush1.bf16.msra.mxu0 0
        %269 = vmatprep.subr.bf16.mxu0 0
        %270 = vmatpush1.bf16.msra.mxu0 0
        %271 = vmatprep.subr.bf16.mxu0 0
        %272 = vmatpush1.bf16.msra.mxu0 0
        %273 = vmatprep.subr.bf16.mxu0 0
        %274 = vmatpush1.bf16.msra.mxu0 0
        %275 = vmatprep.mubr.bf16.mxu0 0
        %276 = vmatmul.mubr.bf16.gmra.mrb[0].mxu0 %v241
        %v277 = vpop.f32.mrb[0].mxu0
        %v278 = vadd.f32 %v227, %v277
        %v279 = vpop.f32.mrb[0].mxu0
        %v280 = vadd.f32 %v231, %v279
        %v281 = vpop.f32.mrb[0].mxu0
        %v282 = vpop.f32.mrb[0].mxu0
        %283 = vdwg.mxu0
        %284 = vmatprep.subr.bf16.mxu0 0
        %285 = vmatpush1.bf16.msra.mxu0 %v216
        %286 = vmatprep.subr.bf16.mxu0 0
        %287 = vmatpush1.bf16.msra.mxu0 %v219
        %288 = vmatprep.subr.bf16.mxu0 0
        %289 = vmatpush1.bf16.msra.mxu0 0
        %290 = vmatprep.subr.bf16.mxu0 0
        %291 = vmatpush1.bf16.msra.mxu0 0
        %292 = vmatprep.subr.bf16.mxu0 0
        %293 = vmatpush1.bf16.msra.mxu0 0
        %294 = vmatprep.subr.bf16.mxu0 0
        %295 = vmatpush1.bf16.msra.mxu0 0
        %296 = vmatprep.subr.bf16.mxu0 0
        %297 = vmatpush1.bf16.msra.mxu0 0
        %298 = vmatprep.subr.bf16.mxu0 0
        %299 = vmatpush1.bf16.msra.mxu0 0
        %300 = vmatprep.subr.bf16.mxu0 0
        %301 = vmatpush1.bf16.msra.mxu0 0
        %302 = vmatprep.subr.bf16.mxu0 0
        %303 = vmatpush1.bf16.msra.mxu0 0
        %304 = vmatprep.subr.bf16.mxu0 0
        %305 = vmatpush1.bf16.msra.mxu0 0
        %306 = vmatprep.subr.bf16.mxu0 0
        %307 = vmatpush1.bf16.msra.mxu0 0
        %308 = vmatprep.subr.bf16.mxu0 0
        %309 = vmatpush1.bf16.msra.mxu0 0
        %310 = vmatprep.subr.bf16.mxu0 0
        %311 = vmatpush1.bf16.msra.mxu0 0
        %312 = vmatprep.subr.bf16.mxu0 0
        %313 = vmatpush1.bf16.msra.mxu0 0
        %314 = vmatprep.subr.bf16.mxu0 0
        %315 = vmatpush1.bf16.msra.mxu0 0
        %316 = vmatprep.mubr.bf16.mxu0 0
        %317 = vmatmul.mubr.bf16.gmra.mrb[0].mxu0 %v241
        %v318 = vpop.f32.mrb[0].mxu0
        %v319 = vadd.f32 %v235, %v318
        %v320 = vpop.f32.mrb[0].mxu0
        %v321 = vpop.f32.mrb[0].mxu0
        %v322 = vpop.f32.mrb[0].mxu0
        %323 = vdwg.mxu0
        %v324 = vmul.f32 %v278, 0.17677669
        %v325 = vpack.c.bf16 %v324, %v324
        %v326 = vpack.c.bf16 %v280, %v280
        %v328 = vsel %vm239, %v325, 0
        %v331 = vsel %vm239, %v326, 0
        %333 = vmatprep.subr.bf16.mxu0 0
        %334 = vmatpush1.bf16.xpose.msra.mxu0 %v331
        %335 = vmatprep.subr.bf16.mxu0 0
        %336 = vmatpush1.bf16.xpose.msra.mxu0 0
        %337 = vmatprep.subr.bf16.mxu0 0
        %338 = vmatpush1.bf16.xpose.msra.mxu0 0
        %339 = vmatprep.subr.bf16.mxu0 0
        %340 = vmatpush1.bf16.xpose.msra.mxu0 0
        %341 = vmatprep.subr.bf16.mxu0 0
        %342 = vmatpush1.bf16.xpose.msra.mxu0 0
        %343 = vmatprep.subr.bf16.mxu0 0
        %344 = vmatpush1.bf16.xpose.msra.mxu0 0
        %345 = vmatprep.subr.bf16.mxu0 0
        %346 = vmatpush1.bf16.xpose.msra.mxu0 0
        %347 = vmatprep.subr.bf16.mxu0 0
        %348 = vmatpush1.bf16.xpose.msra.mxu0 0
        %349 = vmatprep.subr.bf16.mxu0 0
        %350 = vmatpush1.bf16.xpose.msra.mxu0 0
        %351 = vmatprep.subr.bf16.mxu0 0
        %352 = vmatpush1.bf16.xpose.msra.mxu0 0
        %353 = vmatprep.subr.bf16.mxu0 0
        %354 = vmatpush1.bf16.xpose.msra.mxu0 0
        %355 = vmatprep.subr.bf16.mxu0 0
        %356 = vmatpush1.bf16.xpose.msra.mxu0 0
        %357 = vmatprep.subr.bf16.mxu0 0
        %358 = vmatpush1.bf16.xpose.msra.mxu0 0
        %359 = vmatprep.subr.bf16.mxu0 0
        %360 = vmatpush1.bf16.xpose.msra.mxu0 0
        %361 = vmatprep.subr.bf16.mxu0 0
        %362 = vmatpush1.bf16.xpose.msra.mxu0 0
        %363 = vmatprep.subr.bf16.mxu0 0
        %364 = vmatpush1.bf16.xpose.msra.mxu0 0
        %365 = vmatprep.mubr.bf16.mxu0 0
        %366 = vmatmul.mubr.bf16.gmra.mrb[0].mxu0 %v328
        %v367 = vpop.f32.mrb[0].mxu0
        %v368 = vadd.f32 0.0, %v367
        %v369 = vpop.f32.mrb[0].mxu0
        %v370 = vpop.f32.mrb[0].mxu0
        %v371 = vpop.f32.mrb[0].mxu0
        %372 = vdwg.mxu0
        %vm373 = vcmask 64512
        %v374 = vsel %vm373, %v368, -inf
        %375 = vmax.xlane.f32.xlu0 %v374
        %v376 = vpop.xlane.xlu0 %375
        %v377 = vsub.f32 %v368, %v376
        %v378 = vmul.f32 %v377, 1.442695
        %v379 = vpow.pop %v378
        %v380 = vsel %vm373, %v379, 0.0
        %381 = vadd.xlane.f32.xlu0 %v380
        %v382 = vpop.xlane.xlu0 %381
        %v383 = vrcp.pop %v382
        %v384 = vmul.f32 %v379, %v383
        %v385 = vpack.c.bf16 %v384, %v384
        %v386 = vpack.c.bf16 %v319, %v319
        %v388 = vsel %vm373, %v385, 0
        %vm390 = vcmask 1043456
        %v392 = vsel %vm390, %v386, 0
        %394 = vmatprep.subr.bf16.mxu0 0
        %395 = vmatpush1.bf16.msra.mxu0 %v392
        %396 = vmatprep.subr.bf16.mxu0 0
        %397 = vmatpush1.bf16.msra.mxu0 0
        %398 = vmatprep.subr.bf16.mxu0 0
        %399 = vmatpush1.bf16.msra.mxu0 0
        %400 = vmatprep.subr.bf16.mxu0 0
        %401 = vmatpush1.bf16.msra.mxu0 0
        %402 = vmatprep.subr.bf16.mxu0 0
        %403 = vmatpush1.bf16.msra.mxu0 0
        %404 = vmatprep.subr.bf16.mxu0 0
        %405 = vmatpush1.bf16.msra.mxu0 0
        %406 = vmatprep.subr.bf16.mxu0 0
        %407 = vmatpush1.bf16.msra.mxu0 0
        %408 = vmatprep.subr.bf16.mxu0 0
        %409 = vmatpush1.bf16.msra.mxu0 0
        %410 = vmatprep.subr.bf16.mxu0 0
        %411 = vmatpush1.bf16.msra.mxu0 0
        %412 = vmatprep.subr.bf16.mxu0 0
        %413 = vmatpush1.bf16.msra.mxu0 0
        %414 = vmatprep.subr.bf16.mxu0 0
        %415 = vmatpush1.bf16.msra.mxu0 0
        %416 = vmatprep.subr.bf16.mxu0 0
        %417 = vmatpush1.bf16.msra.mxu0 0
        %418 = vmatprep.subr.bf16.mxu0 0
        %419 = vmatpush1.bf16.msra.mxu0 0
        %420 = vmatprep.subr.bf16.mxu0 0
        %421 = vmatpush1.bf16.msra.mxu0 0
        %422 = vmatprep.subr.bf16.mxu0 0
        %423 = vmatpush1.bf16.msra.mxu0 0
        %424 = vmatprep.subr.bf16.mxu0 0
        %425 = vmatpush1.bf16.msra.mxu0 0
        %426 = vmatprep.mubr.bf16.mxu0 0
        %427 = vmatmul.mubr.bf16.gmra.mrb[0].mxu0 %v388
        %v428 = vpop.f32.mrb[0].mxu0
        %v429 = vadd.f32 0.0, %v428
        %v430 = vpop.f32.mrb[0].mxu0
        %v431 = vpop.f32.mrb[0].mxu0
        %v432 = vpop.f32.mrb[0].mxu0
        %433 = vdwg.mxu0
        %v434 = vcombine.high %v429, 0.0
        %v436 = vunpack.c.l.s4 1983009808
        %v437 = vunpack.c.0.s8 %v436
        %v438 = vlaneseq
        %v439 = vshrl.u32 %v438, 7
        %v440 = vsub.s32 %v437, %v439
        %v441 = vrot.slane %v429, %v440
        %v443 = vunpack.c.l.s4 1983009808
        %v444 = vunpack.c.0.s8 %v443
        %v445 = vlaneseq
        %v446 = vshrl.u32 %v445, 7
        %v447 = vsub.s32 %v444, %v446
        %v448 = vrot.slane %v434, %v447
        %v449 = vcombine.high %v441, 0.0
        %v451 = vunpack.c.l.s4 1934713408
        %v452 = vunpack.c.0.s8 %v451
        %v453 = vlaneseq
        %v454 = vshrl.u32 %v453, 7
        %v455 = vsub.s32 %v452, %v454
        %v456 = vrot.slane %v441, %v455
        %v458 = vunpack.c.l.s4 1934713408
        %v459 = vunpack.c.0.s8 %v458
        %v460 = vlaneseq
        %v461 = vshrl.u32 %v460, 7
        %v462 = vsub.s32 %v459, %v461
        %v463 = vrot.slane %v449, %v462
        %v464 = vcombine.high %v448, 0.0
        %v466 = vunpack.c.l.s4 1934713408
        %v467 = vunpack.c.0.s8 %v466
        %v468 = vlaneseq
        %v469 = vshrl.u32 %v468, 7
        %v470 = vsub.s32 %v467, %v469
        %v471 = vrot.slane %v448, %v470
        %v473 = vunpack.c.l.s4 1934713408
        %v474 = vunpack.c.0.s8 %v473
        %v475 = vlaneseq
        %v476 = vshrl.u32 %v475, 7
        %v477 = vsub.s32 %v474, %v476
        %v478 = vrot.slane %v464, %v477
        %v479 = vcombine.high %v456, 0.0
        %v480 = vcombine.high %v463, 0.0
        %v481 = vcombine.high %v471, 0.0
        %v482 = vcombine.high %v478, 0.0
        %484 = vrot.lane.b32.xlu0 %v479, 32
        %v485 = vpop.permute.xlu0 %484
        %488 = vrot.lane.b32.xlu0 %v463, 64
        %v489 = vpop.permute.xlu0 %488
        %492 = vrot.lane.b32.xlu0 %v480, 96
        %v493 = vpop.permute.xlu0 %492
        %496 = vrot.lane.b32.xlu0 %v481, 32
        %v497 = vpop.permute.xlu0 %496
        %500 = vrot.lane.b32.xlu0 %v478, 64
        %v501 = vpop.permute.xlu0 %500
        %504 = vrot.lane.b32.xlu0 %v482, 96
        %v505 = vpop.permute.xlu0 %504
        %v507 = vsel %vm239, %v456, %v485
        %vm508 = vcmask 523264
        %v509 = vsel %vm508, %v507, %v489
        %vm510 = vcmask 785408
        %v511 = vsel %vm510, %v509, %v493
        %v512 = vsel %vm239, %v471, %v497
        %v513 = vsel %vm508, %v512, %v501
        %v514 = vsel %vm510, %v513, %v505
        %v517 = vcombine.low %v511, %v514
        %v519 = vunpack.c.l.s4 1966171168
        %v520 = vunpack.c.0.s8 %v519
        %v521 = vlaneseq
        %v522 = vshrl.u32 %v521, 7
        %v523 = vsub.s32 %v520, %v522
        %v524 = vrot.slane %v517, %v523
        %v526 = vunpack.c.l.s4 1966171168
        %v527 = vunpack.c.0.s8 %v526
        %v528 = vlaneseq
        %v529 = vshrl.u32 %v528, 7
        %v530 = vsub.s32 %v527, %v529
        %v531 = vrot.slane %v524, %v530
        %v533 = vlaneseq
        %vm534 = vcmp.ge.s32.totalorder %v533, 0
        %vm535 = vcmp.lt.s32.totalorder %v533, 256
        %vm536 = vmand %vm534, %vm535
        %537 = vst.msk [vmem:[%s200] sm:$0x3] %vm536, %v531
        %s538 = sand.u32 %s97, 1
        %s539 = scalar_lea.sflag [#allocation4], %s538
        %s540 = sand.u32 %s97, 1
        %s541 = smul.addr %s540, 2
        %s542 = scalar_lea.vmem [#allocation7], %s541
        // Predicated region
        $region41: #{tpu_custom_call.1} parent=31 // pred_check
          %p543 = pneg %p107
        $region42: #{tpu_custom_call.1} parent=31 // pred_check_branch
          %545 = sbr.rel (%p543) target = $region44
        $region43: #{tpu_custom_call.1} parent=31 // pred_region
          %s547 = ssub.s32 32, 32
          %548 = vsyncadd %s539, %s547
          %s549 = smul.addr %s21, 2
          %s550 = smul.addr %s549, 16
          %s551 = scalar_lea.hbm %s3, %s550
          %s553 = sshll.u32 %s542, 4
          %s554 = int_to_ptr.vmem [resolvable:$true] %s553
          %556 = dma.vmem_to_hbm [thread:$0]  %s554, 32, %s551, %s539
        $region44: #{tpu_custom_call.1} parent=31 // pred_fallthru
          _
      $region32: #{tpu_custom_call.1} parent=5 // pred_fallthru
        _
      %p557 = scmp.le.s32.totalorder 2, %s16
      // Predicated region
      $region45: #{tpu_custom_call.1} parent=5 // pred_check
        %p558 = pneg %p557
      $region46: #{tpu_custom_call.1} parent=5 // pred_check_branch
        %560 = sbr.rel (%p558) target = $region48
      $region47: #{tpu_custom_call.1} parent=5 // pred_region
        %s561 = ssub.s32 %s16, 2
        // Predicated region
        $region49: #{tpu_custom_call.1} parent=47 // pred_check
          %p562 = pneg %p113
        $region50: #{tpu_custom_call.1} parent=47 // pred_check_branch
          %564 = sbr.rel (%p562) target = $region52
        $region51: #{tpu_custom_call.1} parent=47 // pred_region
          %s565 = sand.u32 %s98, 1
          %s566 = scalar_lea.sflag [#allocation4], %s565
          %s567 = sand.u32 %s98, 1
          %s568 = smul.addr %s567, 2
          %s569 = scalar_lea.vmem [#allocation7], %s568
          %570 = dma.done %s566, 32
        $region52: #{tpu_custom_call.1} parent=47 // pred_fallthru
          _
      $region48: #{tpu_custom_call.1} parent=5 // pred_fallthru
        _
    $region6: #{tpu_custom_call.1} parent=1 // loop_footer
      %s20 = sadd.s32 1, %s16
    $region7: #{tpu_custom_call.1} parent=1 // loop_footer_branch
      %15 = sbr.rel target = $region3
    $region8: #{tpu_custom_call.1} parent=1 // loop_exit
      _
    %571 = vsyncpa [#allocation3], 1
    %s572 = scalar_lea.sflag [#allocation3], 1
    %573 = vsyncpa %s572, 1
    %574 = vsyncpa [#allocation6], 1
    %575 = vsyncpa [#allocation4], 1
    %s576 = scalar_lea.sflag [#allocation4], 1
    %577 = vsyncpa %s576, 1

</llo_original>
